<compile_context>
chip_gen: v7x
topology: tpu7x:2x2x1
jax: 0.10.0
libtpu: 0.0.40
codegen_flags: <defaults>
</compile_context>

<pallas_src>
import functools

import jax
import jax.numpy as jnp
from jax.experimental import pallas as pl
from jax.experimental.pallas import tpu as pltpu


def _round_up(x, m):
    return (x + m - 1) // m * m


# --------------------------------------------------------------------------
# Kernel: grid over T, hidden state carried in VMEM scratch.
# --------------------------------------------------------------------------
def _irnn_rollout_kernel(x_ref, h0_ref, w1_ref, b1_ref, wg_ref, bg_ref,
                         w2_ref, b2_ref, q_ref, hout_ref, h_sc):
    t = pl.program_id(0)
    AHp = h0_ref.shape[-1]                    # padded n_agents*hidden_dim (mult of 128)

    @pl.when(t == 0)
    def _():
        h_sc[...] = h0_ref[...]

    h_in = h_sc[...]                          # (B, AHp)
    x_in = x_ref[...]                         # (B, A*D)

    # fc1 + ReLU for all agents (block-diagonal, lane-padded columns).
    x = jnp.dot(x_in, w1_ref[...], preferred_element_type=jnp.float32) + b1_ref[...]
    x = jnp.maximum(x, 0.0)                   # (B, AHp)

    # Fused GRU gate matmul: [x | h] @ Wg, columns = [r | z | gx_n | gh_n],
    # each group AHp wide (128-aligned slice boundaries).
    xh = jnp.concatenate([x, h_in], axis=1)   # (B, 2*AHp)
    g = jnp.dot(xh, wg_ref[...], preferred_element_type=jnp.float32) + bg_ref[...]

    rz = jax.nn.sigmoid(g[:, :2 * AHp])       # one EUP slab for r and z
    r = rz[:, :AHp]
    z = rz[:, AHp:]
    n = jnp.tanh(g[:, 2 * AHp:3 * AHp] + r * g[:, 3 * AHp:])
    h_new = n + z * (h_in - n)                # == (1-z)*n + z*h_in

    # fc2 (output lanes padded to 128 -> unmasked full-lane store).
    q = jnp.dot(h_new, w2_ref[...], preferred_element_type=jnp.float32) + b2_ref[...]

    h_sc[...] = h_new
    q_ref[...] = q.astype(q_ref.dtype)

    @pl.when(t == pl.num_programs(0) - 1)
    def _():
        hout_ref[...] = h_new.astype(hout_ref.dtype)


# --------------------------------------------------------------------------
# One-time parameter packing (outside the per-step hot path).
# --------------------------------------------------------------------------
def _block_diag(blocks):
    """(A, K, N) per-agent blocks -> (A*K, A*N) block-diagonal matrix."""
    A, K, N = blocks.shape
    out = jnp.zeros((A * K, A * N), blocks.dtype)
    for a in range(A):
        out = out.at[a * K:(a + 1) * K, a * N:(a + 1) * N].set(blocks[a])
    return out


def pack_params(params, *, n_agents, input_dim, hidden_dim, n_actions, lane=128):
    """Pack per-agent params into lane-padded block-diagonal matrices.

    Gate weight columns are grouped [r | z | gx_n | gh_n] (each AHp wide), with
    the [x | h] halves stacked along rows; bih+bhh are pre-summed for r/z.
    """
    w1, b1, wih, whh, bih, bhh, w2, b2 = params
    A, H = n_agents, hidden_dim
    AH = A * H
    AHp = _round_up(AH, lane)
    Qp = _round_up(A * n_actions, lane)

    def pad_cols(m, total):
        return jnp.pad(m, ((0, 0), (0, total - m.shape[1])))

    # fc1
    w1p = pad_cols(_block_diag(w1), AHp)                       # (A*D, AHp)
    b1p = pad_cols(b1.reshape(1, AH), AHp)                     # (1,   AHp)

    # Gate blocks, block-diagonal per gate, padded to (AHp, AHp).
    def gate_block(w, g):
        m = _block_diag(w[:, :, g * H:(g + 1) * H])            # (AH, AH)
        return jnp.pad(m, ((0, AHp - AH), (0, AHp - AH)))      # (AHp, AHp)

    zeros = jnp.zeros((AHp, AHp), jnp.float32)
    wih_r, wih_z, wih_n = (gate_block(wih, g) for g in range(3))
    whh_r, whh_z, whh_n = (gate_block(whh, g) for g in range(3))

    top = jnp.concatenate([wih_r, wih_z, wih_n, zeros], axis=1)  # x rows
    bot = jnp.concatenate([whh_r, whh_z, zeros, whh_n], axis=1)  # h rows
    wg = jnp.concatenate([top, bot], axis=0)                     # (2*AHp, 4*AHp)

    def gate_bias(b, g):
        return pad_cols(b[:, g * H:(g + 1) * H].reshape(1, AH), AHp)

    bg = jnp.concatenate([
        gate_bias(bih, 0) + gate_bias(bhh, 0),   # r
        gate_bias(bih, 1) + gate_bias(bhh, 1),   # z
        gate_bias(bih, 2),                       # gx_n
        gate_bias(bhh, 2),                       # gh_n
    ], axis=1)                                                   # (1, 4*AHp)

    # fc2
    w2bd = _block_diag(w2)                                       # (AH, A*n_actions)
    w2p = jnp.pad(w2bd, ((0, AHp - AH), (0, Qp - A * n_actions)))
    b2p = pad_cols(b2.reshape(1, A * n_actions), Qp)

    return (w1p, b1p, wg, bg, w2p, b2p)


# --------------------------------------------------------------------------
# Wrappers (PyTorch I/O convention: rows are batch-major, agent-minor).
# --------------------------------------------------------------------------
def irnn_agent_rollout(inputs_seq, hidden_state, packed, *,
                       n_agents, hidden_dim, n_actions, lane=128):
    """inputs_seq: (T, B*A, D); hidden_state: (B*A, H)
       -> q: (T, B*A, n_actions), h_final: (B*A, H)."""
    A = n_agents
    T, rows, D = inputs_seq.shape
    B = rows // A
    AH = A * hidden_dim
    AHp = _round_up(AH, lane)
    Qp = _round_up(A * n_actions, lane)
    ADx = A * D

    # Free reshapes (layout-preserving); only the tiny h gets lane padding.
    x3d = inputs_seq.reshape(T, B, ADx)
    h2d = jnp.pad(hidden_state.reshape(B, AH), ((0, 0), (0, AHp - AH)))

    w1p, b1p, wg, bg, w2p, b2p = packed
    const2d = lambda shape: pl.BlockSpec(shape, lambda t: (0, 0))

    grid_spec = pltpu.PrefetchScalarGridSpec(
        num_scalar_prefetch=0,
        grid=(T,),
        in_specs=[
            pl.BlockSpec((None, B, ADx), lambda t: (t, 0, 0)),   # x_t
            const2d((B, AHp)),                                   # h0
            const2d(w1p.shape), const2d(b1p.shape),
            const2d(wg.shape), const2d(bg.shape),
            const2d(w2p.shape), const2d(b2p.shape),
        ],
        out_specs=(
            pl.BlockSpec((None, B, Qp), lambda t: (t, 0, 0)),    # q_t
            const2d((B, AHp)),                                   # final h
        ),
        scratch_shapes=[pltpu.VMEM((B, AHp), jnp.float32)],
    )

    q3d, hp = pl.pallas_call(
        _irnn_rollout_kernel,
        out_shape=(
            jax.ShapeDtypeStruct((T, B, Qp), jnp.float32),
            jax.ShapeDtypeStruct((B, AHp), jnp.float32),
        ),
        grid_spec=grid_spec,
        compiler_params=pltpu.CompilerParams(dimension_semantics=("arbitrary",)),
    )(x3d, h2d, w1p, b1p, wg, bg, w2p, b2p)

    q = q3d[:, :, :A * n_actions].reshape(T, B * A, n_actions)
    h = hp[:, :AH].reshape(B * A, hidden_dim)
    return q, h


def irnn_agent_forward(inputs, hidden_state, packed, *,
                       n_agents, hidden_dim, n_actions):
    """Single-step forward matching IRNNAgent.forward (T == 1 of the rollout)."""
    q, h = irnn_agent_rollout(inputs[None], hidden_state, packed,
                              n_agents=n_agents, hidden_dim=hidden_dim,
                              n_actions=n_actions)
    return q[0], h


# --------------------------------------------------------------------------
# Parameter construction + pure-JAX reference (validation).
# --------------------------------------------------------------------------
def make_params(key, n_agents, input_dim, hidden_dim, n_actions):
    ks = jax.random.split(key, 8)
    s = 0.1
    w1 = s * jax.random.normal(ks[0], (n_agents, input_dim, hidden_dim), jnp.float32)
    b1 = s * jax.random.normal(ks[1], (n_agents, hidden_dim), jnp.float32)
    wih = s * jax.random.normal(ks[2], (n_agents, hidden_dim, 3 * hidden_dim), jnp.float32)
    whh = s * jax.random.normal(ks[3], (n_agents, hidden_dim, 3 * hidden_dim), jnp.float32)
    bih = s * jax.random.normal(ks[4], (n_agents, 3 * hidden_dim), jnp.float32)
    bhh = s * jax.random.normal(ks[5], (n_agents, 3 * hidden_dim), jnp.float32)
    w2 = s * jax.random.normal(ks[6], (n_agents, hidden_dim, n_actions), jnp.float32)
    b2 = s * jax.random.normal(ks[7], (n_agents, n_actions), jnp.float32)
    return (w1, b1, wih, whh, bih, bhh, w2, b2)


def reference_forward(inputs, hidden_state, params, *, n_agents, hidden_dim, n_actions):
    """Pure-JAX reference mirroring the PyTorch module (single step)."""
    w1, b1, wih, whh, bih, bhh, w2, b2 = params
    D = inputs.shape[1]
    B = inputs.shape[0] // n_agents
    H = hidden_dim
    inp = inputs.reshape(B, n_agents, D)
    h_in = hidden_state.reshape(B, n_agents, H)
    qs, hs = [], []
    for i in range(n_agents):
        x = jnp.maximum(inp[:, i] @ w1[i] + b1[i], 0.0)
        gx = x @ wih[i] + bih[i]
        gh = h_in[:, i] @ whh[i] + bhh[i]
        r = jax.nn.sigmoid(gx[:, :H] + gh[:, :H])
        z = jax.nn.sigmoid(gx[:, H:2 * H] + gh[:, H:2 * H])
        n = jnp.tanh(gx[:, 2 * H:] + r * gh[:, 2 * H:])
        h_new = (1.0 - z) * n + z * h_in[:, i]
        qs.append(h_new @ w2[i] + b2[i])
        hs.append(h_new)
    q = jnp.concatenate(qs, axis=1).reshape(-1, n_actions)
    h = jnp.concatenate(hs, axis=1).reshape(-1, hidden_dim)
    return q, h


def reference_rollout(inputs_seq, hidden_state, params, *, n_agents, hidden_dim, n_actions):
    h = hidden_state
    qs = []
    for t in range(inputs_seq.shape[0]):
        q, h = reference_forward(inputs_seq[t], h, params, n_agents=n_agents,
                                 hidden_dim=hidden_dim, n_actions=n_actions)
        qs.append(q)
    return jnp.stack(qs, 0), h


if __name__ == "__main__":
    n_agents = 3
    input_dim = 16
    hidden_dim = 32
    n_actions = 8
    B = 8      # episodes per call (multiple of 8 -> sublane-aligned blocks)
    T = 8      # rollout length handled inside ONE kernel launch

    key = jax.random.PRNGKey(0)
    k_in, k_h, k_p = jax.random.split(key, 3)

    inputs_seq = jax.random.normal(k_in, (T, B * n_agents, input_dim), jnp.float32)
    hidden = jax.random.normal(k_h, (B * n_agents, hidden_dim), jnp.float32)
    params = make_params(k_p, n_agents, input_dim, hidden_dim, n_actions)

    # One-time packing (amortized over the whole rollout / training run).
    packed = pack_params(params, n_agents=n_agents, input_dim=input_dim,
                         hidden_dim=hidden_dim, n_actions=n_actions)

    rollout = jax.jit(functools.partial(irnn_agent_rollout,
                                        n_agents=n_agents,
                                        hidden_dim=hidden_dim,
                                        n_actions=n_actions))
    q_seq, h_fin = rollout(inputs_seq, hidden, packed)
    jax.block_until_ready((q_seq, h_fin))

    step = jax.jit(functools.partial(irnn_agent_forward,
                                     n_agents=n_agents,
                                     hidden_dim=hidden_dim,
                                     n_actions=n_actions))
    q1, h1 = step(inputs_seq[0], hidden, packed)
    jax.block_until_ready((q1, h1))

    # Pure-JAX references.
    q_ref_seq, h_ref_fin = reference_rollout(inputs_seq, hidden, params,
                                             n_agents=n_agents, hidden_dim=hidden_dim,
                                             n_actions=n_actions)
    q1_ref, h1_ref = reference_forward(inputs_seq[0], hidden, params,
                                       n_agents=n_agents, hidden_dim=hidden_dim,
                                       n_actions=n_actions)

    assert q_seq.shape == (T, B * n_agents, n_actions)
    assert h_fin.shape == (B * n_agents, hidden_dim)
    assert q1.shape == (B * n_agents, n_actions)
    assert h1.shape == (B * n_agents, hidden_dim)

    assert jnp.allclose(q1, q1_ref, atol=1e-4, rtol=1e-4)
    assert jnp.allclose(h1, h1_ref, atol=1e-4, rtol=1e-4)
    assert jnp.allclose(q_seq, q_ref_seq, atol=1e-4, rtol=1e-4)
    assert jnp.allclose(h_fin, h_ref_fin, atol=1e-4, rtol=1e-4)

    print("KERNEL_OK")
</pallas_src>

<mosaic_0001>
module attributes {stable_mosaic.version = 11 : i64} {
  func.func @_irnn_rollout_kernel(%arg0: i32, %arg1: memref<1x8x48xf32, #tpu.memory_space<vmem>>, %arg2: memref<8x128xf32, #tpu.memory_space<vmem>>, %arg3: memref<48x128xf32, #tpu.memory_space<vmem>>, %arg4: memref<1x128xf32, #tpu.memory_space<vmem>>, %arg5: memref<256x512xf32, #tpu.memory_space<vmem>>, %arg6: memref<1x512xf32, #tpu.memory_space<vmem>>, %arg7: memref<128x128xf32, #tpu.memory_space<vmem>>, %arg8: memref<1x128xf32, #tpu.memory_space<vmem>>, %arg9: memref<1x8x128xf32, #tpu.memory_space<vmem>>, %arg10: memref<8x128xf32, #tpu.memory_space<vmem>>, %arg11: memref<8x128xf32, #tpu.memory_space<vmem>>) attributes {dimension_semantics = [#tpu.dimension_semantics<arbitrary>], iteration_bounds = array<i64: 8>, scalar_prefetch = 0 : i64, scratch_operands = 1 : i64, tpu.core_type = #tpu.core_type<tc>, window_params = [{transform_indices = @transform_0, window_bounds = array<i64: 1, 8, 48>}, {pipeline_mode = #tpu.pipeline_mode<synchronous>, transform_indices = @transform_1, window_bounds = array<i64: 8, 128>}, {pipeline_mode = #tpu.pipeline_mode<synchronous>, transform_indices = @transform_2, window_bounds = array<i64: 48, 128>}, {pipeline_mode = #tpu.pipeline_mode<synchronous>, transform_indices = @transform_3, window_bounds = array<i64: 1, 128>}, {pipeline_mode = #tpu.pipeline_mode<synchronous>, transform_indices = @transform_4, window_bounds = array<i64: 256, 512>}, {pipeline_mode = #tpu.pipeline_mode<synchronous>, transform_indices = @transform_5, window_bounds = array<i64: 1, 512>}, {pipeline_mode = #tpu.pipeline_mode<synchronous>, transform_indices = @transform_6, window_bounds = array<i64: 128, 128>}, {pipeline_mode = #tpu.pipeline_mode<synchronous>, transform_indices = @transform_7, window_bounds = array<i64: 1, 128>}, {transform_indices = @transform_8, window_bounds = array<i64: 1, 8, 128>}, {pipeline_mode = #tpu.pipeline_mode<synchronous>, transform_indices = @transform_9, window_bounds = array<i64: 8, 128>}]} {
    %c0_i32 = arith.constant 0 : i32
    %0 = arith.cmpi eq, %arg0, %c0_i32 : i32
    %1 = arith.extui %0 : i1 to i32
    %c0_i32_0 = arith.constant 0 : i32
    %2 = arith.cmpi ne, %1, %c0_i32_0 : i32
    scf.if %2 {
      %c0_27 = arith.constant 0 : index
      %c0_28 = arith.constant 0 : index
      %47 = vector.load %arg2[%c0_27, %c0_28] : memref<8x128xf32, #tpu.memory_space<vmem>>, vector<8x128xf32>
      %c0_29 = arith.constant 0 : index
      %c0_30 = arith.constant 0 : index
      %48 = vector.load %arg11[%c0_29, %c0_30] : memref<8x128xf32, #tpu.memory_space<vmem>>, vector<8x128xf32>
      tpu.vector_store %arg11[%c0_29, %c0_30], %47 {strides = array<i32>} : memref<8x128xf32, #tpu.memory_space<vmem>>, vector<8x128xf32>,
    } else {
    }
    %c0 = arith.constant 0 : index
    %c0_1 = arith.constant 0 : index
    %3 = vector.load %arg11[%c0, %c0_1] : memref<8x128xf32, #tpu.memory_space<vmem>>, vector<8x128xf32>
    %c0_2 = arith.constant 0 : index
    %c0_3 = arith.constant 0 : index
    %c0_4 = arith.constant 0 : index
    %4 = vector.load %arg1[%c0_2, %c0_3, %c0_4] : memref<1x8x48xf32, #tpu.memory_space<vmem>>, vector<1x8x48xf32>
    %5 = vector.shape_cast %4 : vector<1x8x48xf32> to vector<8x48xf32>
    %c0_5 = arith.constant 0 : index
    %c0_6 = arith.constant 0 : index
    %6 = vector.load %arg3[%c0_5, %c0_6] : memref<48x128xf32, #tpu.memory_space<vmem>>, vector<48x128xf32>
    %cst = arith.constant dense<0.000000e+00> : vector<8x128xf32>
    %7 = tpu.matmul %5, %6, %cst {dimension_numbers = #tpu.dot_dimension_numbers<[1], [0], [0], [1], [0, 0, 1, 1], [], []>} : vector<8x48xf32>, vector<48x128xf32>, vector<8x128xf32> -> vector<8x128xf32>
    %c0_7 = arith.constant 0 : index
    %c0_8 = arith.constant 0 : index
    %8 = vector.load %arg4[%c0_7, %c0_8] : memref<1x128xf32, #tpu.memory_space<vmem>>, vector<1x128xf32>
    %9 = vector.broadcast %8 : vector<1x128xf32> to vector<8x128xf32>
    %10 = arith.addf %7, %9 : vector<8x128xf32>
    %cst_9 = arith.constant 0.000000e+00 : f32
    %11 = vector.broadcast %cst_9 : f32 to vector<8x128xf32>
    %12 = arith.maximumf %10, %11 : vector<8x128xf32>
    %13 = tpu.concatenate %12, %3 in 1 : vector<8x128xf32>, vector<8x128xf32> -> vector<8x256xf32>
    %c0_10 = arith.constant 0 : index
    %c0_11 = arith.constant 0 : index
    %14 = vector.load %arg5[%c0_10, %c0_11] : memref<256x512xf32, #tpu.memory_space<vmem>>, vector<256x512xf32>
    %cst_12 = arith.constant dense<0.000000e+00> : vector<8x512xf32>
    %15 = tpu.matmul %13, %14, %cst_12 {dimension_numbers = #tpu.dot_dimension_numbers<[1], [0], [0], [1], [0, 0, 1, 1], [], []>} : vector<8x256xf32>, vector<256x512xf32>, vector<8x512xf32> -> vector<8x512xf32>
    %c0_13 = arith.constant 0 : index
    %c0_14 = arith.constant 0 : index
    %16 = vector.load %arg6[%c0_13, %c0_14] : memref<1x512xf32, #tpu.memory_space<vmem>>, vector<1x512xf32>
    %17 = vector.broadcast %16 : vector<1x512xf32> to vector<8x512xf32>
    %18 = arith.addf %15, %17 : vector<8x512xf32>
    %19 = vector.extract_strided_slice %18 {offsets = [0, 0], sizes = [8, 256], strides = [1, 1]} : vector<8x512xf32> to vector<8x256xf32>
    %20 = arith.negf %19 : vector<8x256xf32>
    %21 = math.exp %20 : vector<8x256xf32>
    %cst_15 = arith.constant 1.000000e+00 : f32
    %22 = vector.broadcast %cst_15 : f32 to vector<8x256xf32>
    %23 = arith.addf %22, %21 : vector<8x256xf32>
    %24 = arith.divf %22, %23 : vector<8x256xf32>
    %25 = vector.extract_strided_slice %24 {offsets = [0, 0], sizes = [8, 128], strides = [1, 1]} : vector<8x256xf32> to vector<8x128xf32>
    %26 = vector.extract_strided_slice %24 {offsets = [0, 128], sizes = [8, 128], strides = [1, 1]} : vector<8x256xf32> to vector<8x128xf32>
    %27 = vector.extract_strided_slice %18 {offsets = [0, 256], sizes = [8, 128], strides = [1, 1]} : vector<8x512xf32> to vector<8x128xf32>
    %28 = vector.extract_strided_slice %18 {offsets = [0, 384], sizes = [8, 128], strides = [1, 1]} : vector<8x512xf32> to vector<8x128xf32>
    %29 = arith.mulf %25, %28 : vector<8x128xf32>
    %30 = arith.addf %27, %29 : vector<8x128xf32>
    %31 = math.tanh %30 : vector<8x128xf32>
    %32 = arith.subf %3, %31 : vector<8x128xf32>
    %33 = arith.mulf %26, %32 : vector<8x128xf32>
    %34 = arith.addf %31, %33 : vector<8x128xf32>
    %c0_16 = arith.constant 0 : index
    %c0_17 = arith.constant 0 : index
    %35 = vector.load %arg7[%c0_16, %c0_17] : memref<128x128xf32, #tpu.memory_space<vmem>>, vector<128x128xf32>
    %cst_18 = arith.constant dense<0.000000e+00> : vector<8x128xf32>
    %36 = tpu.matmul %34, %35, %cst_18 {dimension_numbers = #tpu.dot_dimension_numbers<[1], [0], [0], [1], [0, 0, 1, 1], [], []>} : vector<8x128xf32>, vector<128x128xf32>, vector<8x128xf32> -> vector<8x128xf32>
    %c0_19 = arith.constant 0 : index
    %c0_20 = arith.constant 0 : index
    %37 = vector.load %arg8[%c0_19, %c0_20] : memref<1x128xf32, #tpu.memory_space<vmem>>, vector<1x128xf32>
    %38 = vector.broadcast %37 : vector<1x128xf32> to vector<8x128xf32>
    %39 = arith.addf %36, %38 : vector<8x128xf32>
    %c0_21 = arith.constant 0 : index
    %c0_22 = arith.constant 0 : index
    %40 = vector.load %arg11[%c0_21, %c0_22] : memref<8x128xf32, #tpu.memory_space<vmem>>, vector<8x128xf32>
    tpu.vector_store %arg11[%c0_21, %c0_22], %34 {strides = array<i32>} : memref<8x128xf32, #tpu.memory_space<vmem>>, vector<8x128xf32>,
    %c0_23 = arith.constant 0 : index
    %c0_24 = arith.constant 0 : index
    %c0_25 = arith.constant 0 : index
    %41 = vector.load %arg9[%c0_23, %c0_24, %c0_25] : memref<1x8x128xf32, #tpu.memory_space<vmem>>, vector<1x8x128xf32>
    %42 = vector.shape_cast %41 : vector<1x8x128xf32> to vector<8x128xf32>
    %43 = vector.shape_cast %39 : vector<8x128xf32> to vector<1x8x128xf32>
    tpu.vector_store %arg9[%c0_23, %c0_24, %c0_25], %43 {strides = array<i32>} : memref<1x8x128xf32, #tpu.memory_space<vmem>>, vector<1x8x128xf32>,
    %c7_i32 = arith.constant 7 : i32
    %44 = arith.cmpi eq, %arg0, %c7_i32 : i32
    %45 = arith.extui %44 : i1 to i32
    %c0_i32_26 = arith.constant 0 : i32
    %46 = arith.cmpi ne, %45, %c0_i32_26 : i32
    scf.if %46 {
      %c0_27 = arith.constant 0 : index
      %c0_28 = arith.constant 0 : index
      %47 = vector.load %arg10[%c0_27, %c0_28] : memref<8x128xf32, #tpu.memory_space<vmem>>, vector<8x128xf32>
      tpu.vector_store %arg10[%c0_27, %c0_28], %34 {strides = array<i32>} : memref<8x128xf32, #tpu.memory_space<vmem>>, vector<8x128xf32>,
    } else {
    }
    return
  }
  func.func @transform_0(%arg0: i32) -> (i32, i32, i32) {
    %c0_i32 = arith.constant 0 : i32
    %c0_i32_0 = arith.constant 0 : i32
    %c0_i32_1 = arith.constant 0 : i32
    return %arg0, %c0_i32, %c0_i32_0 : i32, i32, i32
  }
  func.func @transform_1(%arg0: i32) -> (i32, i32) {
    %c0_i32 = arith.constant 0 : i32
    %c0_i32_0 = arith.constant 0 : i32
    %c0_i32_1 = arith.constant 0 : i32
    return %c0_i32, %c0_i32_0 : i32, i32
  }
  func.func @transform_2(%arg0: i32) -> (i32, i32) {
    %c0_i32 = arith.constant 0 : i32
    %c0_i32_0 = arith.constant 0 : i32
    %c0_i32_1 = arith.constant 0 : i32
    return %c0_i32, %c0_i32_0 : i32, i32
  }
  func.func @transform_3(%arg0: i32) -> (i32, i32) {
    %c0_i32 = arith.constant 0 : i32
    %c0_i32_0 = arith.constant 0 : i32
    %c0_i32_1 = arith.constant 0 : i32
    return %c0_i32, %c0_i32_0 : i32, i32
  }
  func.func @transform_4(%arg0: i32) -> (i32, i32) {
    %c0_i32 = arith.constant 0 : i32
    %c0_i32_0 = arith.constant 0 : i32
    %c0_i32_1 = arith.constant 0 : i32
    return %c0_i32, %c0_i32_0 : i32, i32
  }
  func.func @transform_5(%arg0: i32) -> (i32, i32) {
    %c0_i32 = arith.constant 0 : i32
    %c0_i32_0 = arith.constant 0 : i32
    %c0_i32_1 = arith.constant 0 : i32
    return %c0_i32, %c0_i32_0 : i32, i32
  }
  func.func @transform_6(%arg0: i32) -> (i32, i32) {
    %c0_i32 = arith.constant 0 : i32
    %c0_i32_0 = arith.constant 0 : i32
    %c0_i32_1 = arith.constant 0 : i32
    return %c0_i32, %c0_i32_0 : i32, i32
  }
  func.func @transform_7(%arg0: i32) -> (i32, i32) {
    %c0_i32 = arith.constant 0 : i32
    %c0_i32_0 = arith.constant 0 : i32
    %c0_i32_1 = arith.constant 0 : i32
    return %c0_i32, %c0_i32_0 : i32, i32
  }
  func.func @transform_8(%arg0: i32) -> (i32, i32, i32) {
    %c0_i32 = arith.constant 0 : i32
    %c0_i32_0 = arith.constant 0 : i32
    %c0_i32_1 = arith.constant 0 : i32
    return %arg0, %c0_i32, %c0_i32_0 : i32, i32, i32
  }
  func.func @transform_9(%arg0: i32) -> (i32, i32) {
    %c0_i32 = arith.constant 0 : i32
    %c0_i32_0 = arith.constant 0 : i32
    %c0_i32_1 = arith.constant 0 : i32
    return %c0_i32, %c0_i32_0 : i32, i32
  }
}

</mosaic_0001>

<llo_original>
// kernel: irnn_agent_rollout.1
$region0: #{irnn_agent_rollout.1}
  #allocation0 [shape = 'u32[]', space=smem, size = 0x4, offset = 0x4, fixed_abs, tag = 'smem constant byte address 0x4 - core index']
  #allocation1 [shape = 'u32[144,128]{1,0:T(1,128)}', space=vmem, size = 0x12000, scoped, tag = 'internal scratch']
  #allocation2 [shape = 'f32[8,128]{1,0:T(8,128)}', space=vmem, size = 0x1000, scoped, tag = 'scratch operand']
  %s0 = inlined_call_operand.vmem [shape: f32[8,8,48], index: 0, kind: input, shape index: {}]
  %s1 = inlined_call_operand.vmem [shape: f32[8,128], index: 1, kind: input, shape index: {}]
  %s2 = inlined_call_operand.vmem [shape: f32[48,128], index: 2, kind: input, shape index: {}]
  %s3 = inlined_call_operand.vmem [shape: f32[1,128], index: 3, kind: input, shape index: {}]
  %s4 = inlined_call_operand.hbm [shape: f32[256,512], index: 4, kind: input, shape index: {}]
  %s5 = inlined_call_operand.vmem [shape: f32[1,512], index: 5, kind: input, shape index: {}]
  %s6 = inlined_call_operand.vmem [shape: f32[128,128], index: 6, kind: input, shape index: {}]
  %s7 = inlined_call_operand.vmem [shape: f32[1,128], index: 7, kind: input, shape index: {}]
  %s8 = inlined_call_operand.vmem [shape: f32[8,8,128], index: 8, kind: output, shape index: {0}]
  %s9 = inlined_call_operand.vmem [shape: f32[8,128], index: 9, kind: output, shape index: {1}]
  %10 = xla_tuple %s8, %s9
  %s11 = sld [smem:[#allocation0]]
  $region85: #{irnn_agent_rollout.1} parent=0
    _
  %s13 = ssub.s32 1, %s11
  %s14 = scalar_select 0, %s13, %s11
  $region1: #{irnn_agent_rollout.1} parent=0
    #allocation3 [shape = 'u8[524288]{0}', space=vmem, size = 0x80000, scoped, tag = 'input window, operand 4, single buffered']
    #allocation4 [shape = 's32[2]{0}', space=sflag, size = 0x8, scoped, tag = 'scoped memory for irnn_agent_rollout.1']
    %15 = vsyncpa [#allocation4], 0
    loop: start=0, step=1, limit=10
    $region2: #{irnn_agent_rollout.1} parent=1 // loop_pre_header
      _
    $region3: #{irnn_agent_rollout.1} parent=1 // loop_header
      %s17 = sphi 0, %s21
      %p18 = scmp.ge.s32.totalorder %s17, 10
      %s27 = sphi 0, %s29
      %s30 = sphi 0, %s27
      %s31 = sphi 0, %s30
      %s47 = sphi 0, %s31
      %s51 = sphi 0, %s51
      %s53 = sphi 0, %s51
      %s54 = sphi 0, %s53
      %s68 = sphi 0, %s54
      %s72 = sphi 0, %s72
      %s74 = sphi 0, %s72
      %s75 = sphi 0, %s74
      %s89 = sphi 0, %s75
      %s93 = sphi 0, %s93
      %s95 = sphi 0, %s93
      %s96 = sphi 0, %s95
      %s110 = sphi 0, %s96
      %s114 = sphi 0, %s114
      %s116 = sphi 0, %s114
      %s117 = sphi 0, %s116
      %s131 = sphi 0, %s117
      %s135 = sphi 0, %s135
      %s137 = sphi 0, %s135
      %s138 = sphi 0, %s137
      %s152 = sphi 0, %s138
      %s156 = sphi 0, %s156
      %s158 = sphi 0, %s156
      %s159 = sphi 0, %s158
      %s173 = sphi 0, %s159
      %s177 = sphi 0, %s177
      %s179 = sphi 0, %s177
      %s180 = sphi 0, %s179
      %s194 = sphi 0, %s180
      %s200 = sphi 0, %s202
      %s203 = sphi 0, %s200
      %s204 = sphi 0, %s203
      %s220 = sphi 0, %s204
      %s224 = sphi 0, %s224
      %s226 = sphi 0, %s224
      %s227 = sphi 0, %s226
      %s241 = sphi 0, %s227
    $region4: #{irnn_agent_rollout.1} parent=1 // loop_header_branch
      %20 = sbr.rel (%p18) target = $region8
    $region5: #{irnn_agent_rollout.1} parent=1 // loop_body
      %s22 = ssub.s32 %s17, 1
      %s23 = ssub.s32 %s17, 2
      %s24 = sadd.s32 %s17, 1
      %s25 = ssub.s32 %s17, %s24
      %p26 = scmp.eq.s32.totalorder %s25, 0
      %s28 = sadd.s32 %s27, 1
      %s29 = scalar_select %p26, %s27, %s28
      %p32 = pneg %p26
      %p33 = scmp.eq.s32.totalorder %s17, 7
      %p34 = por %p32, %p33
      %p35 = scmp.ne.s32.totalorder %s27, %s30
      %p36 = scmp.eq.s32.totalorder %s17, 0
      %p37 = por %p35, %p36
      %p38 = scmp.ne.s32.totalorder %s27, %s30
      %p39 = scmp.eq.s32.totalorder %s22, 7
      %p40 = por %p38, %p39
      %p41 = scmp.ne.s32.totalorder %s30, %s31
      %p42 = scmp.eq.s32.totalorder %s22, 0
      %p43 = por %p41, %p42
      %p44 = scmp.ne.s32.totalorder %s30, %s31
      %p45 = scmp.eq.s32.totalorder %s23, 7
      %p46 = por %p44, %p45
      %p48 = scmp.ne.s32.totalorder %s31, %s47
      %p49 = scmp.eq.s32.totalorder %s23, 0
      %p50 = por %p48, %p49
      %s52 = sadd.s32 %s51, 1
      %p55 = scmp.eq.s32.totalorder %s17, 7
      %p56 = scmp.ne.s32.totalorder %s51, %s53
      %p57 = scmp.eq.s32.totalorder %s17, 0
      %p58 = por %p56, %p57
      %p59 = scmp.ne.s32.totalorder %s51, %s53
      %p60 = scmp.eq.s32.totalorder %s22, 7
      %p61 = por %p59, %p60
      %p62 = scmp.ne.s32.totalorder %s53, %s54
      %p63 = scmp.eq.s32.totalorder %s22, 0
      %p64 = por %p62, %p63
      %p65 = scmp.ne.s32.totalorder %s53, %s54
      %p66 = scmp.eq.s32.totalorder %s23, 7
      %p67 = por %p65, %p66
      %p69 = scmp.ne.s32.totalorder %s54, %s68
      %p70 = scmp.eq.s32.totalorder %s23, 0
      %p71 = por %p69, %p70
      %s73 = sadd.s32 %s72, 1
      %p76 = scmp.eq.s32.totalorder %s17, 7
      %p77 = scmp.ne.s32.totalorder %s72, %s74
      %p78 = scmp.eq.s32.totalorder %s17, 0
      %p79 = por %p77, %p78
      %p80 = scmp.ne.s32.totalorder %s72, %s74
      %p81 = scmp.eq.s32.totalorder %s22, 7
      %p82 = por %p80, %p81
      %p83 = scmp.ne.s32.totalorder %s74, %s75
      %p84 = scmp.eq.s32.totalorder %s22, 0
      %p85 = por %p83, %p84
      %p86 = scmp.ne.s32.totalorder %s74, %s75
      %p87 = scmp.eq.s32.totalorder %s23, 7
      %p88 = por %p86, %p87
      %p90 = scmp.ne.s32.totalorder %s75, %s89
      %p91 = scmp.eq.s32.totalorder %s23, 0
      %p92 = por %p90, %p91
      %s94 = sadd.s32 %s93, 1
      %p97 = scmp.eq.s32.totalorder %s17, 7
      %p98 = scmp.ne.s32.totalorder %s93, %s95
      %p99 = scmp.eq.s32.totalorder %s17, 0
      %p100 = por %p98, %p99
      %p101 = scmp.ne.s32.totalorder %s93, %s95
      %p102 = scmp.eq.s32.totalorder %s22, 7
      %p103 = por %p101, %p102
      %p104 = scmp.ne.s32.totalorder %s95, %s96
      %p105 = scmp.eq.s32.totalorder %s22, 0
      %p106 = por %p104, %p105
      %p107 = scmp.ne.s32.totalorder %s95, %s96
      %p108 = scmp.eq.s32.totalorder %s23, 7
      %p109 = por %p107, %p108
      %p111 = scmp.ne.s32.totalorder %s96, %s110
      %p112 = scmp.eq.s32.totalorder %s23, 0
      %p113 = por %p111, %p112
      %s115 = sadd.s32 %s114, 1
      %p118 = scmp.eq.s32.totalorder %s17, 7
      %p119 = scmp.ne.s32.totalorder %s114, %s116
      %p120 = scmp.eq.s32.totalorder %s17, 0
      %p121 = por %p119, %p120
      %p122 = scmp.ne.s32.totalorder %s114, %s116
      %p123 = scmp.eq.s32.totalorder %s22, 7
      %p124 = por %p122, %p123
      %p125 = scmp.ne.s32.totalorder %s116, %s117
      %p126 = scmp.eq.s32.totalorder %s22, 0
      %p127 = por %p125, %p126
      %p128 = scmp.ne.s32.totalorder %s116, %s117
      %p129 = scmp.eq.s32.totalorder %s23, 7
      %p130 = por %p128, %p129
      %p132 = scmp.ne.s32.totalorder %s117, %s131
      %p133 = scmp.eq.s32.totalorder %s23, 0
      %p134 = por %p132, %p133
      %s136 = sadd.s32 %s135, 1
      %p139 = scmp.eq.s32.totalorder %s17, 7
      %p140 = scmp.ne.s32.totalorder %s135, %s137
      %p141 = scmp.eq.s32.totalorder %s17, 0
      %p142 = por %p140, %p141
      %p143 = scmp.ne.s32.totalorder %s135, %s137
      %p144 = scmp.eq.s32.totalorder %s22, 7
      %p145 = por %p143, %p144
      %p146 = scmp.ne.s32.totalorder %s137, %s138
      %p147 = scmp.eq.s32.totalorder %s22, 0
      %p148 = por %p146, %p147
      %p149 = scmp.ne.s32.totalorder %s137, %s138
      %p150 = scmp.eq.s32.totalorder %s23, 7
      %p151 = por %p149, %p150
      %p153 = scmp.ne.s32.totalorder %s138, %s152
      %p154 = scmp.eq.s32.totalorder %s23, 0
      %p155 = por %p153, %p154
      %s157 = sadd.s32 %s156, 1
      %p160 = scmp.eq.s32.totalorder %s17, 7
      %p161 = scmp.ne.s32.totalorder %s156, %s158
      %p162 = scmp.eq.s32.totalorder %s17, 0
      %p163 = por %p161, %p162
      %p164 = scmp.ne.s32.totalorder %s156, %s158
      %p165 = scmp.eq.s32.totalorder %s22, 7
      %p166 = por %p164, %p165
      %p167 = scmp.ne.s32.totalorder %s158, %s159
      %p168 = scmp.eq.s32.totalorder %s22, 0
      %p169 = por %p167, %p168
      %p170 = scmp.ne.s32.totalorder %s158, %s159
      %p171 = scmp.eq.s32.totalorder %s23, 7
      %p172 = por %p170, %p171
      %p174 = scmp.ne.s32.totalorder %s159, %s173
      %p175 = scmp.eq.s32.totalorder %s23, 0
      %p176 = por %p174, %p175
      %s178 = sadd.s32 %s177, 1
      %p181 = scmp.eq.s32.totalorder %s17, 7
      %p182 = scmp.ne.s32.totalorder %s177, %s179
      %p183 = scmp.eq.s32.totalorder %s17, 0
      %p184 = por %p182, %p183
      %p185 = scmp.ne.s32.totalorder %s177, %s179
      %p186 = scmp.eq.s32.totalorder %s22, 7
      %p187 = por %p185, %p186
      %p188 = scmp.ne.s32.totalorder %s179, %s180
      %p189 = scmp.eq.s32.totalorder %s22, 0
      %p190 = por %p188, %p189
      %p191 = scmp.ne.s32.totalorder %s179, %s180
      %p192 = scmp.eq.s32.totalorder %s23, 7
      %p193 = por %p191, %p192
      %p195 = scmp.ne.s32.totalorder %s180, %s194
      %p196 = scmp.eq.s32.totalorder %s23, 0
      %p197 = por %p195, %p196
      %s198 = ssub.s32 %s17, %s24
      %p199 = scmp.eq.s32.totalorder %s198, 0
      %s201 = sadd.s32 %s200, 1
      %s202 = scalar_select %p199, %s200, %s201
      %p205 = pneg %p199
      %p206 = scmp.eq.s32.totalorder %s17, 7
      %p207 = por %p205, %p206
      %p208 = scmp.ne.s32.totalorder %s200, %s203
      %p209 = scmp.eq.s32.totalorder %s17, 0
      %p210 = por %p208, %p209
      %p211 = scmp.ne.s32.totalorder %s200, %s203
      %p212 = scmp.eq.s32.totalorder %s22, 7
      %p213 = por %p211, %p212
      %p214 = scmp.ne.s32.totalorder %s203, %s204
      %p215 = scmp.eq.s32.totalorder %s22, 0
      %p216 = por %p214, %p215
      %p217 = scmp.ne.s32.totalorder %s203, %s204
      %p218 = scmp.eq.s32.totalorder %s23, 7
      %p219 = por %p217, %p218
      %p221 = scmp.ne.s32.totalorder %s204, %s220
      %p222 = scmp.eq.s32.totalorder %s23, 0
      %p223 = por %p221, %p222
      %s225 = sadd.s32 %s224, 1
      %p228 = scmp.eq.s32.totalorder %s17, 7
      %p229 = scmp.ne.s32.totalorder %s224, %s226
      %p230 = scmp.eq.s32.totalorder %s17, 0
      %p231 = por %p229, %p230
      %p232 = scmp.ne.s32.totalorder %s224, %s226
      %p233 = scmp.eq.s32.totalorder %s22, 7
      %p234 = por %p232, %p233
      %p235 = scmp.ne.s32.totalorder %s226, %s227
      %p236 = scmp.eq.s32.totalorder %s22, 0
      %p237 = por %p235, %p236
      %p238 = scmp.ne.s32.totalorder %s226, %s227
      %p239 = scmp.eq.s32.totalorder %s23, 7
      %p240 = por %p238, %p239
      %p242 = scmp.ne.s32.totalorder %s227, %s241
      %p243 = scmp.eq.s32.totalorder %s23, 0
      %p244 = por %p242, %p243
      %p245 = scmp.le.s32.totalorder 1, %s17
      %p246 = scmp.lt.s32.totalorder %s17, 9
      %p247 = pnand %p245, %p246
      %p248 = pneg %p247
      // Predicated region
      $region9: #{irnn_agent_rollout.1} parent=5 // pred_check
        _
      $region10: #{irnn_agent_rollout.1} parent=5 // pred_check_branch
        %250 = sbr.rel (%p247) target = $region12
      $region11: #{irnn_agent_rollout.1} parent=5 // pred_region
        %s251 = ssub.s32 %s17, 1
        // Predicated region
        $region13: #{irnn_agent_rollout.1} parent=11 // pred_check
          %p252 = pneg %p64
        $region14: #{irnn_agent_rollout.1} parent=11 // pred_check_branch
          %254 = sbr.rel (%p252) target = $region16
        $region15: #{irnn_agent_rollout.1} parent=11 // pred_region
          _
        $region16: #{irnn_agent_rollout.1} parent=11 // pred_fallthru
          _
        // Predicated region
        $region17: #{irnn_agent_rollout.1} parent=11 // pred_check
          %p255 = pneg %p85
        $region18: #{irnn_agent_rollout.1} parent=11 // pred_check_branch
          %257 = sbr.rel (%p255) target = $region20
        $region19: #{irnn_agent_rollout.1} parent=11 // pred_region
          _
        $region20: #{irnn_agent_rollout.1} parent=11 // pred_fallthru
          _
        // Predicated region
        $region21: #{irnn_agent_rollout.1} parent=11 // pred_check
          %p258 = pneg %p106
        $region22: #{irnn_agent_rollout.1} parent=11 // pred_check_branch
          %260 = sbr.rel (%p258) target = $region24
        $region23: #{irnn_agent_rollout.1} parent=11 // pred_region
          _
        $region24: #{irnn_agent_rollout.1} parent=11 // pred_fallthru
          _
        // Predicated region
        $region25: #{irnn_agent_rollout.1} parent=11 // pred_check
          %p261 = pneg %p127
        $region26: #{irnn_agent_rollout.1} parent=11 // pred_check_branch
          %263 = sbr.rel (%p261) target = $region28
        $region27: #{irnn_agent_rollout.1} parent=11 // pred_region
          %s265 = ssub.s32 16384, 16384
          %266 = vsyncadd [#allocation4], %s265
          %s267 = sshll.u32 [#allocation3], 4
          %s268 = int_to_ptr.vmem [resolvable:$true] %s267
          %273 = dma.hbm_to_vmem [thread:$0]  %s4, 16384, %s268, [#allocation4], 512, 512, 32
        $region28: #{irnn_agent_rollout.1} parent=11 // pred_fallthru
          _
        // Predicated region
        $region29: #{irnn_agent_rollout.1} parent=11 // pred_check
          %p274 = pneg %p148
        $region30: #{irnn_agent_rollout.1} parent=11 // pred_check_branch
          %276 = sbr.rel (%p274) target = $region32
        $region31: #{irnn_agent_rollout.1} parent=11 // pred_region
          _
        $region32: #{irnn_agent_rollout.1} parent=11 // pred_fallthru
          _
        // Predicated region
        $region33: #{irnn_agent_rollout.1} parent=11 // pred_check
          %p277 = pneg %p169
        $region34: #{irnn_agent_rollout.1} parent=11 // pred_check_branch
          %279 = sbr.rel (%p277) target = $region36
        $region35: #{irnn_agent_rollout.1} parent=11 // pred_region
          _
        $region36: #{irnn_agent_rollout.1} parent=11 // pred_fallthru
          _
        // Predicated region
        $region37: #{irnn_agent_rollout.1} parent=11 // pred_check
          %p280 = pneg %p190
        $region38: #{irnn_agent_rollout.1} parent=11 // pred_check_branch
          %282 = sbr.rel (%p280) target = $region40
        $region39: #{irnn_agent_rollout.1} parent=11 // pred_region
          _
        $region40: #{irnn_agent_rollout.1} parent=11 // pred_fallthru
          _
      $region12: #{irnn_agent_rollout.1} parent=5 // pred_fallthru
        _
      %p283 = scmp.lt.s32.totalorder %s17, 8
      // Predicated region
      $region41: #{irnn_agent_rollout.1} parent=5 // pred_check
        %p284 = pneg %p283
      $region42: #{irnn_agent_rollout.1} parent=5 // pred_check_branch
        %286 = sbr.rel (%p284) target = $region44
      $region43: #{irnn_agent_rollout.1} parent=5 // pred_region
        // Predicated region
        $region45: #{irnn_agent_rollout.1} parent=43 // pred_check
          %p287 = pneg %p37
        $region46: #{irnn_agent_rollout.1} parent=43 // pred_check_branch
          %289 = sbr.rel (%p287) target = $region48
        $region47: #{irnn_agent_rollout.1} parent=43 // pred_region
          %p290 = scmp.lt.s32.totalorder %s17, 7
          %s291 = scalar_select %p290, %s17, 7
          %s292 = smul.addr %s291, 8
          %s293 = scalar_lea.vmem %s0, %s292
        $region48: #{irnn_agent_rollout.1} parent=43 // pred_fallthru
          _
      $region44: #{irnn_agent_rollout.1} parent=5 // pred_fallthru
        _
      %p294 = scmp.le.s32.totalorder 1, %s17
      %p295 = scmp.lt.s32.totalorder %s17, 9
      %p296 = pnand %p294, %p295
      %p297 = pneg %p296
      // Predicated region
      $region49: #{irnn_agent_rollout.1} parent=5 // pred_check
        _
      $region50: #{irnn_agent_rollout.1} parent=5 // pred_check_branch
        %299 = sbr.rel (%p296) target = $region52
      $region51: #{irnn_agent_rollout.1} parent=5 // pred_region
        %s300 = ssub.s32 %s17, 1
        // Predicated region
        $region53: #{irnn_agent_rollout.1} parent=51 // pred_check
          %p301 = pneg %p127
        $region54: #{irnn_agent_rollout.1} parent=51 // pred_check_branch
          %303 = sbr.rel (%p301) target = $region56
        $region55: #{irnn_agent_rollout.1} parent=51 // pred_region
          %304 = dma.done [#allocation4], 16384
        $region56: #{irnn_agent_rollout.1} parent=51 // pred_fallthru
          _
        %p305 = scmp.lt.s32.totalorder %s22, 7
        %s306 = scalar_select %p305, %s22, 7
        %s307 = smul.addr %s306, 8
        %s308 = scalar_lea.vmem %s0, %s307
        %p309 = pneg %p43
        %p310 = pneg %p40
        %p311 = pneg %p64
        %p312 = pneg %p61
        %p313 = pneg %p85
        %p314 = pneg %p82
        %p315 = pneg %p106
        %p316 = pneg %p103
        %p317 = pneg %p127
        %p318 = pneg %p124
        %p319 = pneg %p148
        %p320 = pneg %p145
        %p321 = pneg %p169
        %p322 = pneg %p166
        %p323 = pneg %p190
        %p324 = pneg %p187
        %p325 = pneg %p216
        %p326 = pneg %p213
        %p327 = scmp.lt.s32.totalorder %s22, 7
        %s328 = scalar_select %p327, %s22, 7
        %s329 = smul.addr %s328, 8
        %s330 = scalar_lea.vmem %s8, %s329
        %p331 = pneg %p237
        %p332 = pneg %p234
        %p333 = scmp.lt.s32.totalorder %s22, 7
        %s334 = scalar_select %p333, %s22, 7
        %s335 = smul.addr %s334, 8
        %s336 = scalar_lea.vmem %s0, %s335
        %p337 = scmp.lt.s32.totalorder %s22, 7
        %s338 = scalar_select %p337, %s22, 7
        %s339 = smul.addr %s338, 8
        %s340 = scalar_lea.vmem %s8, %s339
        %p341 = scmp.eq.s32.totalorder %s22, 0
        // Predicated region
        $region57: #{irnn_agent_rollout.1} parent=51 // pred_check
          %p342 = pneg %p341
        $region58: #{irnn_agent_rollout.1} parent=51 // pred_check_branch
          %344 = sbr.rel (%p342) target = $region60
        $region59: #{irnn_agent_rollout.1} parent=51 // pred_region
          %v345 = vld [vmem:[%s1] sm:$0xff]
          %346 = vst [vmem:[#allocation2] sm:$0xff] %v345
        $region60: #{irnn_agent_rollout.1} parent=51 // pred_fallthru
          _
        %v347 = vld [vmem:[#allocation2] sm:$0xff]
        %v348 = vld [vmem:[%s336] sm:$0xff]
        %v349 = vld [vmem:[%s2] sm:$0xff]
        %v350 = vld [vmem:[%s2 + $0x8] sm:$0xff]
        %v351 = vld [vmem:[%s2 + $0x10] sm:$0xff]
        %v352 = vld [vmem:[%s2 + $0x18] sm:$0xff]
        %v353 = vld [vmem:[%s2 + $0x20] sm:$0xff]
        %v354 = vld [vmem:[%s2 + $0x28] sm:$0xff]
        %v355 = vld [vmem:[%s3] sm:$0x1]
        %v357 = vlaneseq
        %v358 = vshrl.u32 %v357, 7
        %v359 = vsub.s32 0, %v358
        %v360 = vrot.slane %v355, %v359
        %vm362 = vcmask 392192
        %v364 = vsel %vm362, %v348, 0
        %366 = vmatprep.subr.mxu0 0.0
        %367 = vmatpush1.msra.mxu0 %v349
        %368 = vmatprep.subr.mxu0 0.0
        %369 = vmatpush1.msra.mxu0 %v350
        %370 = vmatprep.subr.mxu0 0.0
        %371 = vmatpush1.msra.mxu0 %v351
        %372 = vmatprep.subr.mxu0 0.0
        %373 = vmatpush1.msra.mxu0 %v352
        %374 = vmatprep.subr.mxu0 0.0
        %375 = vmatpush1.msra.mxu0 %v353
        %376 = vmatprep.subr.mxu0 0.0
        %377 = vmatpush1.msra.mxu0 %v354
        %378 = vmatprep.subr.mxu0 0.0
        %379 = vmatpush1.msra.mxu0 0.0
        %380 = vmatprep.subr.mxu0 0.0
        %381 = vmatpush1.msra.mxu0 0.0
        %382 = vmatprep.subr.mxu0 0.0
        %383 = vmatpush1.msra.mxu0 0.0
        %384 = vmatprep.subr.mxu0 0.0
        %385 = vmatpush1.msra.mxu0 0.0
        %386 = vmatprep.subr.mxu0 0.0
        %387 = vmatpush1.msra.mxu0 0.0
        %388 = vmatprep.subr.mxu0 0.0
        %389 = vmatpush1.msra.mxu0 0.0
        %390 = vmatprep.subr.mxu0 0.0
        %391 = vmatpush1.msra.mxu0 0.0
        %392 = vmatprep.subr.mxu0 0.0
        %393 = vmatpush1.msra.mxu0 0.0
        %394 = vmatprep.subr.mxu0 0.0
        %395 = vmatpush1.msra.mxu0 0.0
        %396 = vmatprep.subr.mxu0 0.0
        %397 = vmatpush1.msra.mxu0 0.0
        %398 = vmatprep.subr.mxu0 0.0
        %399 = vmatpush1.msra.mxu0 0.0
        %400 = vmatprep.subr.mxu0 0.0
        %401 = vmatpush1.msra.mxu0 0.0
        %402 = vmatprep.subr.mxu0 0.0
        %403 = vmatpush1.msra.mxu0 0.0
        %404 = vmatprep.subr.mxu0 0.0
        %405 = vmatpush1.msra.mxu0 0.0
        %406 = vmatprep.subr.mxu0 0.0
        %407 = vmatpush1.msra.mxu0 0.0
        %408 = vmatprep.subr.mxu0 0.0
        %409 = vmatpush1.msra.mxu0 0.0
        %410 = vmatprep.subr.mxu0 0.0
        %411 = vmatpush1.msra.mxu0 0.0
        %412 = vmatprep.subr.mxu0 0.0
        %413 = vmatpush1.msra.mxu0 0.0
        %414 = vmatprep.subr.mxu0 0.0
        %415 = vmatpush1.msra.mxu0 0.0
        %416 = vmatprep.subr.mxu0 0.0
        %417 = vmatpush1.msra.mxu0 0.0
        %418 = vmatprep.subr.mxu0 0.0
        %419 = vmatpush1.msra.mxu0 0.0
        %420 = vmatprep.subr.mxu0 0.0
        %421 = vmatpush1.msra.mxu0 0.0
        %422 = vmatprep.subr.mxu0 0.0
        %423 = vmatpush1.msra.mxu0 0.0
        %424 = vmatprep.subr.mxu0 0.0
        %425 = vmatpush1.msra.mxu0 0.0
        %426 = vmatprep.subr.mxu0 0.0
        %427 = vmatpush1.msra.mxu0 0.0
        %428 = vmatprep.subr.mxu0 0.0
        %429 = vmatpush1.msra.mxu0 0.0
        %430 = vmatprep.mubr.f32.mxu0 0.0
        %431 = vmatmul.mubr.f32.gmra.mrb[0].mxu0 %v364
        %v432 = vpop.f32.mrb[0].mxu0
        %v433 = vadd.f32 %v360, %v432
        %v434 = vpop.f32.mrb[0].mxu0
        %435 = vdwg.mxu0
        %v436 = vmax.f32 %v433, 0.0
        %v437 = vld [vmem:[#allocation3] sm:$0xff]
        %v438 = vld [vmem:[#allocation3 + $0x8] sm:$0xff]
        %v439 = vld [vmem:[#allocation3 + $0x10] sm:$0xff]
        %v440 = vld [vmem:[#allocation3 + $0x18] sm:$0xff]
        %v441 = vld [vmem:[#allocation3 + $0x20] sm:$0xff]
        %v442 = vld [vmem:[#allocation3 + $0x28] sm:$0xff]
        %v443 = vld [vmem:[#allocation3 + $0x30] sm:$0xff]
        %v444 = vld [vmem:[#allocation3 + $0x38] sm:$0xff]
        %v445 = vld [vmem:[#allocation3 + $0x40] sm:$0xff]
        %v446 = vld [vmem:[#allocation3 + $0x48] sm:$0xff]
        %v447 = vld [vmem:[#allocation3 + $0x50] sm:$0xff]
        %v448 = vld [vmem:[#allocation3 + $0x58] sm:$0xff]
        %v449 = vld [vmem:[#allocation3 + $0x60] sm:$0xff]
        %v450 = vld [vmem:[#allocation3 + $0x68] sm:$0xff]
        %v451 = vld [vmem:[#allocation3 + $0x70] sm:$0xff]
        %v452 = vld [vmem:[#allocation3 + $0x78] sm:$0xff]
        %v453 = vld [vmem:[#allocation3 + $0x80] sm:$0xff]
        %v454 = vld [vmem:[#allocation3 + $0x88] sm:$0xff]
        %v455 = vld [vmem:[#allocation3 + $0x90] sm:$0xff]
        %v456 = vld [vmem:[#allocation3 + $0x98] sm:$0xff]
        %v457 = vld [vmem:[#allocation3 + $0xa0] sm:$0xff]
        %v458 = vld [vmem:[#allocation3 + $0xa8] sm:$0xff]
        %v459 = vld [vmem:[#allocation3 + $0xb0] sm:$0xff]
        %v460 = vld [vmem:[#allocation3 + $0xb8] sm:$0xff]
        %v461 = vld [vmem:[#allocation3 + $0xc0] sm:$0xff]
        %v462 = vld [vmem:[#allocation3 + $0xc8] sm:$0xff]
        %v463 = vld [vmem:[#allocation3 + $0xd0] sm:$0xff]
        %v464 = vld [vmem:[#allocation3 + $0xd8] sm:$0xff]
        %v465 = vld [vmem:[#allocation3 + $0xe0] sm:$0xff]
        %v466 = vld [vmem:[#allocation3 + $0xe8] sm:$0xff]
        %v467 = vld [vmem:[#allocation3 + $0xf0] sm:$0xff]
        %v468 = vld [vmem:[#allocation3 + $0xf8] sm:$0xff]
        %v469 = vld [vmem:[#allocation3 + $0x100] sm:$0xff]
        %v470 = vld [vmem:[#allocation3 + $0x108] sm:$0xff]
        %v471 = vld [vmem:[#allocation3 + $0x110] sm:$0xff]
        %v472 = vld [vmem:[#allocation3 + $0x118] sm:$0xff]
        %v473 = vld [vmem:[#allocation3 + $0x120] sm:$0xff]
        %v474 = vld [vmem:[#allocation3 + $0x128] sm:$0xff]
        %v475 = vld [vmem:[#allocation3 + $0x130] sm:$0xff]
        %v476 = vld [vmem:[#allocation3 + $0x138] sm:$0xff]
        %v477 = vld [vmem:[#allocation3 + $0x140] sm:$0xff]
        %v478 = vld [vmem:[#allocation3 + $0x148] sm:$0xff]
        %v479 = vld [vmem:[#allocation3 + $0x150] sm:$0xff]
        %v480 = vld [vmem:[#allocation3 + $0x158] sm:$0xff]
        %v481 = vld [vmem:[#allocation3 + $0x160] sm:$0xff]
        %v482 = vld [vmem:[#allocation3 + $0x168] sm:$0xff]
        %v483 = vld [vmem:[#allocation3 + $0x170] sm:$0xff]
        %v484 = vld [vmem:[#allocation3 + $0x178] sm:$0xff]
        %v485 = vld [vmem:[#allocation3 + $0x180] sm:$0xff]
        %v486 = vld [vmem:[#allocation3 + $0x188] sm:$0xff]
        %v487 = vld [vmem:[#allocation3 + $0x190] sm:$0xff]
        %v488 = vld [vmem:[#allocation3 + $0x198] sm:$0xff]
        %v489 = vld [vmem:[#allocation3 + $0x1a0] sm:$0xff]
        %v490 = vld [vmem:[#allocation3 + $0x1a8] sm:$0xff]
        %v491 = vld [vmem:[#allocation3 + $0x1b0] sm:$0xff]
        %v492 = vld [vmem:[#allocation3 + $0x1b8] sm:$0xff]
        %v493 = vld [vmem:[#allocation3 + $0x1c0] sm:$0xff]
        %v494 = vld [vmem:[#allocation3 + $0x1c8] sm:$0xff]
        %v495 = vld [vmem:[#allocation3 + $0x1d0] sm:$0xff]
        %v496 = vld [vmem:[#allocation3 + $0x1d8] sm:$0xff]
        %v497 = vld [vmem:[#allocation3 + $0x1e0] sm:$0xff]
        %v498 = vld [vmem:[#allocation3 + $0x1e8] sm:$0xff]
        %v499 = vld [vmem:[#allocation3 + $0x1f0] sm:$0xff]
        %v500 = vld [vmem:[#allocation3 + $0x1f8] sm:$0xff]
        %v501 = vld [vmem:[#allocation3 + $0x200] sm:$0xff]
        %v502 = vld [vmem:[#allocation3 + $0x208] sm:$0xff]
        %v503 = vld [vmem:[#allocation3 + $0x210] sm:$0xff]
        %v504 = vld [vmem:[#allocation3 + $0x218] sm:$0xff]
        %v505 = vld [vmem:[#allocation3 + $0x220] sm:$0xff]
        %v506 = vld [vmem:[#allocation3 + $0x228] sm:$0xff]
        %v507 = vld [vmem:[#allocation3 + $0x230] sm:$0xff]
        %v508 = vld [vmem:[#allocation3 + $0x238] sm:$0xff]
        %v509 = vld [vmem:[#allocation3 + $0x240] sm:$0xff]
        %v510 = vld [vmem:[#allocation3 + $0x248] sm:$0xff]
        %v511 = vld [vmem:[#allocation3 + $0x250] sm:$0xff]
        %v512 = vld [vmem:[#allocation3 + $0x258] sm:$0xff]
        %v513 = vld [vmem:[#allocation3 + $0x260] sm:$0xff]
        %v514 = vld [vmem:[#allocation3 + $0x268] sm:$0xff]
        %v515 = vld [vmem:[#allocation3 + $0x270] sm:$0xff]
        %v516 = vld [vmem:[#allocation3 + $0x278] sm:$0xff]
        %v517 = vld [vmem:[#allocation3 + $0x280] sm:$0xff]
        %v518 = vld [vmem:[#allocation3 + $0x288] sm:$0xff]
        %v519 = vld [vmem:[#allocation3 + $0x290] sm:$0xff]
        %v520 = vld [vmem:[#allocation3 + $0x298] sm:$0xff]
        %v521 = vld [vmem:[#allocation3 + $0x2a0] sm:$0xff]
        %v522 = vld [vmem:[#allocation3 + $0x2a8] sm:$0xff]
        %v523 = vld [vmem:[#allocation3 + $0x2b0] sm:$0xff]
        %v524 = vld [vmem:[#allocation3 + $0x2b8] sm:$0xff]
        %v525 = vld [vmem:[#allocation3 + $0x2c0] sm:$0xff]
        %v526 = vld [vmem:[#allocation3 + $0x2c8] sm:$0xff]
        %v527 = vld [vmem:[#allocation3 + $0x2d0] sm:$0xff]
        %v528 = vld [vmem:[#allocation3 + $0x2d8] sm:$0xff]
        %v529 = vld [vmem:[#allocation3 + $0x2e0] sm:$0xff]
        %v530 = vld [vmem:[#allocation3 + $0x2e8] sm:$0xff]
        %v531 = vld [vmem:[#allocation3 + $0x2f0] sm:$0xff]
        %v532 = vld [vmem:[#allocation3 + $0x2f8] sm:$0xff]
        %v533 = vld [vmem:[#allocation3 + $0x300] sm:$0xff]
        %v534 = vld [vmem:[#allocation3 + $0x308] sm:$0xff]
        %v535 = vld [vmem:[#allocation3 + $0x310] sm:$0xff]
        %v536 = vld [vmem:[#allocation3 + $0x318] sm:$0xff]
        %v537 = vld [vmem:[#allocation3 + $0x320] sm:$0xff]
        %v538 = vld [vmem:[#allocation3 + $0x328] sm:$0xff]
        %v539 = vld [vmem:[#allocation3 + $0x330] sm:$0xff]
        %v540 = vld [vmem:[#allocation3 + $0x338] sm:$0xff]
        %v541 = vld [vmem:[#allocation3 + $0x340] sm:$0xff]
        %v542 = vld [vmem:[#allocation3 + $0x348] sm:$0xff]
        %v543 = vld [vmem:[#allocation3 + $0x350] sm:$0xff]
        %v544 = vld [vmem:[#allocation3 + $0x358] sm:$0xff]
        %v545 = vld [vmem:[#allocation3 + $0x360] sm:$0xff]
        %v546 = vld [vmem:[#allocation3 + $0x368] sm:$0xff]
        %v547 = vld [vmem:[#allocation3 + $0x370] sm:$0xff]
        %v548 = vld [vmem:[#allocation3 + $0x378] sm:$0xff]
        %v549 = vld [vmem:[#allocation3 + $0x380] sm:$0xff]
        %v550 = vld [vmem:[#allocation3 + $0x388] sm:$0xff]
        %v551 = vld [vmem:[#allocation3 + $0x390] sm:$0xff]
        %v552 = vld [vmem:[#allocation3 + $0x398] sm:$0xff]
        %v553 = vld [vmem:[#allocation3 + $0x3a0] sm:$0xff]
        %v554 = vld [vmem:[#allocation3 + $0x3a8] sm:$0xff]
        %v555 = vld [vmem:[#allocation3 + $0x3b0] sm:$0xff]
        %v556 = vld [vmem:[#allocation3 + $0x3b8] sm:$0xff]
        %v557 = vld [vmem:[#allocation3 + $0x3c0] sm:$0xff]
        %v558 = vld [vmem:[#allocation3 + $0x3c8] sm:$0xff]
        %v559 = vld [vmem:[#allocation3 + $0x3d0] sm:$0xff]
        %v560 = vld [vmem:[#allocation3 + $0x3d8] sm:$0xff]
        %v561 = vld [vmem:[#allocation3 + $0x3e0] sm:$0xff]
        %v562 = vld [vmem:[#allocation3 + $0x3e8] sm:$0xff]
        %v563 = vld [vmem:[#allocation3 + $0x3f0] sm:$0xff]
        %v564 = vld [vmem:[#allocation3 + $0x3f8] sm:$0xff]
        %v565 = vld [vmem:[%s5] sm:$0xf]
        %v567 = vlaneseq
        %v568 = vshrl.u32 %v567, 7
        %v569 = vsub.s32 0, %v568
        %v570 = vrot.slane %v565, %v569
        %v571 = vlaneseq
        %v572 = vshrl.u32 %v571, 7
        %v573 = vsub.s32 1, %v572
        %v574 = vrot.slane %v565, %v573
        %v575 = vlaneseq
        %v576 = vshrl.u32 %v575, 7
        %v577 = vsub.s32 2, %v576
        %v578 = vrot.slane %v565, %v577
        %v579 = vlaneseq
        %v580 = vshrl.u32 %v579, 7
        %v581 = vsub.s32 3, %v580
        %v582 = vrot.slane %v565, %v581
        %587 = vmatprep.subr.mxu0 %v438
        %588 = vmatpush1.msra.mxu0 %v437
        %589 = vmatprep.subr.mxu0 %v442
        %590 = vmatpush1.msra.mxu0 %v441
        %591 = vmatprep.subr.mxu0 %v446
        %592 = vmatpush1.msra.mxu0 %v445
        %593 = vmatprep.subr.mxu0 %v450
        %594 = vmatpush1.msra.mxu0 %v449
        %595 = vmatprep.subr.mxu0 %v454
        %596 = vmatpush1.msra.mxu0 %v453
        %597 = vmatprep.subr.mxu0 %v458
        %598 = vmatpush1.msra.mxu0 %v457
        %599 = vmatprep.subr.mxu0 %v462
        %600 = vmatpush1.msra.mxu0 %v461
        %601 = vmatprep.subr.mxu0 %v466
        %602 = vmatpush1.msra.mxu0 %v465
        %603 = vmatprep.subr.mxu0 %v470
        %604 = vmatpush1.msra.mxu0 %v469
        %605 = vmatprep.subr.mxu0 %v474
        %606 = vmatpush1.msra.mxu0 %v473
        %607 = vmatprep.subr.mxu0 %v478
        %608 = vmatpush1.msra.mxu0 %v477
        %609 = vmatprep.subr.mxu0 %v482
        %610 = vmatpush1.msra.mxu0 %v481
        %611 = vmatprep.subr.mxu0 %v486
        %612 = vmatpush1.msra.mxu0 %v485
        %613 = vmatprep.subr.mxu0 %v490
        %614 = vmatpush1.msra.mxu0 %v489
        %615 = vmatprep.subr.mxu0 %v494
        %616 = vmatpush1.msra.mxu0 %v493
        %617 = vmatprep.subr.mxu0 %v498
        %618 = vmatpush1.msra.mxu0 %v497
        %619 = vmatprep.subr.mxu0 %v502
        %620 = vmatpush1.msra.mxu0 %v501
        %621 = vmatprep.subr.mxu0 %v506
        %622 = vmatpush1.msra.mxu0 %v505
        %623 = vmatprep.subr.mxu0 %v510
        %624 = vmatpush1.msra.mxu0 %v509
        %625 = vmatprep.subr.mxu0 %v514
        %626 = vmatpush1.msra.mxu0 %v513
        %627 = vmatprep.subr.mxu0 %v518
        %628 = vmatpush1.msra.mxu0 %v517
        %629 = vmatprep.subr.mxu0 %v522
        %630 = vmatpush1.msra.mxu0 %v521
        %631 = vmatprep.subr.mxu0 %v526
        %632 = vmatpush1.msra.mxu0 %v525
        %633 = vmatprep.subr.mxu0 %v530
        %634 = vmatpush1.msra.mxu0 %v529
        %635 = vmatprep.subr.mxu0 %v534
        %636 = vmatpush1.msra.mxu0 %v533
        %637 = vmatprep.subr.mxu0 %v538
        %638 = vmatpush1.msra.mxu0 %v537
        %639 = vmatprep.subr.mxu0 %v542
        %640 = vmatpush1.msra.mxu0 %v541
        %641 = vmatprep.subr.mxu0 %v546
        %642 = vmatpush1.msra.mxu0 %v545
        %643 = vmatprep.subr.mxu0 %v550
        %644 = vmatpush1.msra.mxu0 %v549
        %645 = vmatprep.subr.mxu0 %v554
        %646 = vmatpush1.msra.mxu0 %v553
        %647 = vmatprep.subr.mxu0 %v558
        %648 = vmatpush1.msra.mxu0 %v557
        %649 = vmatprep.subr.mxu0 %v562
        %650 = vmatpush1.msra.mxu0 %v561
        %651 = vmatprep.mubr.f32.mxu0 %v347
        %652 = vmatmul.mubr.f32.gmra.mrb[0].mxu0 %v436
        %v653 = vpop.f32.mrb[0].mxu0
        %v654 = vadd.f32 %v570, %v653
        %v655 = vpop.f32.mrb[0].mxu0
        %v656 = vadd.f32 %v574, %v655
        %657 = vdwg.mxu0
        %658 = vmatprep.subr.mxu0 %v440
        %659 = vmatpush1.msra.mxu0 %v439
        %660 = vmatprep.subr.mxu0 %v444
        %661 = vmatpush1.msra.mxu0 %v443
        %662 = vmatprep.subr.mxu0 %v448
        %663 = vmatpush1.msra.mxu0 %v447
        %664 = vmatprep.subr.mxu0 %v452
        %665 = vmatpush1.msra.mxu0 %v451
        %666 = vmatprep.subr.mxu0 %v456
        %667 = vmatpush1.msra.mxu0 %v455
        %668 = vmatprep.subr.mxu0 %v460
        %669 = vmatpush1.msra.mxu0 %v459
        %670 = vmatprep.subr.mxu0 %v464
        %671 = vmatpush1.msra.mxu0 %v463
        %672 = vmatprep.subr.mxu0 %v468
        %673 = vmatpush1.msra.mxu0 %v467
        %674 = vmatprep.subr.mxu0 %v472
        %675 = vmatpush1.msra.mxu0 %v471
        %676 = vmatprep.subr.mxu0 %v476
        %677 = vmatpush1.msra.mxu0 %v475
        %678 = vmatprep.subr.mxu0 %v480
        %679 = vmatpush1.msra.mxu0 %v479
        %680 = vmatprep.subr.mxu0 %v484
        %681 = vmatpush1.msra.mxu0 %v483
        %682 = vmatprep.subr.mxu0 %v488
        %683 = vmatpush1.msra.mxu0 %v487
        %684 = vmatprep.subr.mxu0 %v492
        %685 = vmatpush1.msra.mxu0 %v491
        %686 = vmatprep.subr.mxu0 %v496
        %687 = vmatpush1.msra.mxu0 %v495
        %688 = vmatprep.subr.mxu0 %v500
        %689 = vmatpush1.msra.mxu0 %v499
        %690 = vmatprep.subr.mxu0 %v504
        %691 = vmatpush1.msra.mxu0 %v503
        %692 = vmatprep.subr.mxu0 %v508
        %693 = vmatpush1.msra.mxu0 %v507
        %694 = vmatprep.subr.mxu0 %v512
        %695 = vmatpush1.msra.mxu0 %v511
        %696 = vmatprep.subr.mxu0 %v516
        %697 = vmatpush1.msra.mxu0 %v515
        %698 = vmatprep.subr.mxu0 %v520
        %699 = vmatpush1.msra.mxu0 %v519
        %700 = vmatprep.subr.mxu0 %v524
        %701 = vmatpush1.msra.mxu0 %v523
        %702 = vmatprep.subr.mxu0 %v528
        %703 = vmatpush1.msra.mxu0 %v527
        %704 = vmatprep.subr.mxu0 %v532
        %705 = vmatpush1.msra.mxu0 %v531
        %706 = vmatprep.subr.mxu0 %v536
        %707 = vmatpush1.msra.mxu0 %v535
        %708 = vmatprep.subr.mxu0 %v540
        %709 = vmatpush1.msra.mxu0 %v539
        %710 = vmatprep.subr.mxu0 %v544
        %711 = vmatpush1.msra.mxu0 %v543
        %712 = vmatprep.subr.mxu0 %v548
        %713 = vmatpush1.msra.mxu0 %v547
        %714 = vmatprep.subr.mxu0 %v552
        %715 = vmatpush1.msra.mxu0 %v551
        %716 = vmatprep.subr.mxu0 %v556
        %717 = vmatpush1.msra.mxu0 %v555
        %718 = vmatprep.subr.mxu0 %v560
        %719 = vmatpush1.msra.mxu0 %v559
        %720 = vmatprep.subr.mxu0 %v564
        %721 = vmatpush1.msra.mxu0 %v563
        %722 = vmatprep.mubr.f32.mxu0 %v347
        %723 = vmatmul.mubr.f32.gmra.mrb[0].mxu0 %v436
        %v724 = vpop.f32.mrb[0].mxu0
        %v725 = vadd.f32 %v578, %v724
        %v726 = vpop.f32.mrb[0].mxu0
        %v727 = vadd.f32 %v582, %v726
        %728 = vdwg.mxu0
        %v729 = vxor.u32 %v654, 2147483648
        %v730 = vxor.u32 %v656, 2147483648
        %v731 = vmul.f32 %v729, 1.442695
        %v732 = vpow.pop %v731
        %v733 = vmul.f32 %v730, 1.442695
        %v734 = vpow.pop %v733
        %v735 = vadd.f32 %v732, 1.0
        %v736 = vadd.f32 %v734, 1.0
        %v737 = vrcp.pop %v735
        %v738 = vmul.f32 1.0, %v737
        %v739 = vrcp.pop %v736
        %v740 = vmul.f32 1.0, %v739
        %v741 = vmul.f32 %v738, %v727
        %v742 = vadd.f32 %v725, %v741
        %v743 = vtanh.pop %v742
        %v744 = vsub.f32 %v347, %v743
        %v745 = vmul.f32 %v740, %v744
        %v746 = vadd.f32 %v743, %v745
        %v747 = vld [vmem:[%s6] sm:$0xff]
        %v748 = vld [vmem:[%s6 + $0x8] sm:$0xff]
        %v749 = vld [vmem:[%s6 + $0x10] sm:$0xff]
        %v750 = vld [vmem:[%s6 + $0x18] sm:$0xff]
        %v751 = vld [vmem:[%s6 + $0x20] sm:$0xff]
        %v752 = vld [vmem:[%s6 + $0x28] sm:$0xff]
        %v753 = vld [vmem:[%s6 + $0x30] sm:$0xff]
        %v754 = vld [vmem:[%s6 + $0x38] sm:$0xff]
        %v755 = vld [vmem:[%s6 + $0x40] sm:$0xff]
        %v756 = vld [vmem:[%s6 + $0x48] sm:$0xff]
        %v757 = vld [vmem:[%s6 + $0x50] sm:$0xff]
        %v758 = vld [vmem:[%s6 + $0x58] sm:$0xff]
        %v759 = vld [vmem:[%s6 + $0x60] sm:$0xff]
        %v760 = vld [vmem:[%s6 + $0x68] sm:$0xff]
        %v761 = vld [vmem:[%s6 + $0x70] sm:$0xff]
        %v762 = vld [vmem:[%s6 + $0x78] sm:$0xff]
        %v763 = vld [vmem:[%s7] sm:$0x1]
        %v765 = vlaneseq
        %v766 = vshrl.u32 %v765, 7
        %v767 = vsub.s32 0, %v766
        %v768 = vrot.slane %v763, %v767
        %770 = vmatprep.subr.mxu0 0.0
        %771 = vmatpush1.msra.mxu0 %v747
        %772 = vmatprep.subr.mxu0 0.0
        %773 = vmatpush1.msra.mxu0 %v748
        %774 = vmatprep.subr.mxu0 0.0
        %775 = vmatpush1.msra.mxu0 %v749
        %776 = vmatprep.subr.mxu0 0.0
        %777 = vmatpush1.msra.mxu0 %v750
        %778 = vmatprep.subr.mxu0 0.0
        %779 = vmatpush1.msra.mxu0 %v751
        %780 = vmatprep.subr.mxu0 0.0
        %781 = vmatpush1.msra.mxu0 %v752
        %782 = vmatprep.subr.mxu0 0.0
        %783 = vmatpush1.msra.mxu0 %v753
        %784 = vmatprep.subr.mxu0 0.0
        %785 = vmatpush1.msra.mxu0 %v754
        %786 = vmatprep.subr.mxu0 0.0
        %787 = vmatpush1.msra.mxu0 %v755
        %788 = vmatprep.subr.mxu0 0.0
        %789 = vmatpush1.msra.mxu0 %v756
        %790 = vmatprep.subr.mxu0 0.0
        %791 = vmatpush1.msra.mxu0 %v757
        %792 = vmatprep.subr.mxu0 0.0
        %793 = vmatpush1.msra.mxu0 %v758
        %794 = vmatprep.subr.mxu0 0.0
        %795 = vmatpush1.msra.mxu0 %v759
        %796 = vmatprep.subr.mxu0 0.0
        %797 = vmatpush1.msra.mxu0 %v760
        %798 = vmatprep.subr.mxu0 0.0
        %799 = vmatpush1.msra.mxu0 %v761
        %800 = vmatprep.subr.mxu0 0.0
        %801 = vmatpush1.msra.mxu0 %v762
        %802 = vmatprep.subr.mxu0 0.0
        %803 = vmatpush1.msra.mxu0 0.0
        %804 = vmatprep.subr.mxu0 0.0
        %805 = vmatpush1.msra.mxu0 0.0
        %806 = vmatprep.subr.mxu0 0.0
        %807 = vmatpush1.msra.mxu0 0.0
        %808 = vmatprep.subr.mxu0 0.0
        %809 = vmatpush1.msra.mxu0 0.0
        %810 = vmatprep.subr.mxu0 0.0
        %811 = vmatpush1.msra.mxu0 0.0
        %812 = vmatprep.subr.mxu0 0.0
        %813 = vmatpush1.msra.mxu0 0.0
        %814 = vmatprep.subr.mxu0 0.0
        %815 = vmatpush1.msra.mxu0 0.0
        %816 = vmatprep.subr.mxu0 0.0
        %817 = vmatpush1.msra.mxu0 0.0
        %818 = vmatprep.subr.mxu0 0.0
        %819 = vmatpush1.msra.mxu0 0.0
        %820 = vmatprep.subr.mxu0 0.0
        %821 = vmatpush1.msra.mxu0 0.0
        %822 = vmatprep.subr.mxu0 0.0
        %823 = vmatpush1.msra.mxu0 0.0
        %824 = vmatprep.subr.mxu0 0.0
        %825 = vmatpush1.msra.mxu0 0.0
        %826 = vmatprep.subr.mxu0 0.0
        %827 = vmatpush1.msra.mxu0 0.0
        %828 = vmatprep.subr.mxu0 0.0
        %829 = vmatpush1.msra.mxu0 0.0
        %830 = vmatprep.subr.mxu0 0.0
        %831 = vmatpush1.msra.mxu0 0.0
        %832 = vmatprep.subr.mxu0 0.0
        %833 = vmatpush1.msra.mxu0 0.0
        %834 = vmatprep.mubr.f32.mxu0 0.0
        %835 = vmatmul.mubr.f32.gmra.mrb[0].mxu0 %v746
        %v836 = vpop.f32.mrb[0].mxu0
        %v837 = vadd.f32 %v768, %v836
        %v838 = vpop.f32.mrb[0].mxu0
        %839 = vdwg.mxu0
        %840 = vst [vmem:[#allocation2] sm:$0xff] %v746
        %841 = vst [vmem:[%s340] sm:$0xff] %v837
        %p842 = scmp.eq.s32.totalorder %s22, 7
        // Predicated region
        $region61: #{irnn_agent_rollout.1} parent=51 // pred_check
          %p843 = pneg %p842
        $region62: #{irnn_agent_rollout.1} parent=51 // pred_check_branch
          %845 = sbr.rel (%p843) target = $region64
        $region63: #{irnn_agent_rollout.1} parent=51 // pred_region
          %846 = vst [vmem:[%s9] sm:$0xff] %v746
        $region64: #{irnn_agent_rollout.1} parent=51 // pred_fallthru
          _
        %p847 = scmp.lt.s32.totalorder %s22, 7
        %s848 = scalar_select %p847, %s22, 7
        %s849 = smul.addr %s848, 8
        %s850 = scalar_lea.vmem %s8, %s849
        // Predicated region
        $region65: #{irnn_agent_rollout.1} parent=51 // pred_check
          %p851 = pneg %p213
        $region66: #{irnn_agent_rollout.1} parent=51 // pred_check_branch
          %853 = sbr.rel (%p851) target = $region68
        $region67: #{irnn_agent_rollout.1} parent=51 // pred_region
          _
        $region68: #{irnn_agent_rollout.1} parent=51 // pred_fallthru
          _
        // Predicated region
        $region69: #{irnn_agent_rollout.1} parent=51 // pred_check
          %p854 = pneg %p234
        $region70: #{irnn_agent_rollout.1} parent=51 // pred_check_branch
          %856 = sbr.rel (%p854) target = $region72
        $region71: #{irnn_agent_rollout.1} parent=51 // pred_region
          _
        $region72: #{irnn_agent_rollout.1} parent=51 // pred_fallthru
          _
        // Predicated region
        $region73: #{irnn_agent_rollout.1} parent=51 // pred_check
          %p857 = pneg %p234
        $region74: #{irnn_agent_rollout.1} parent=51 // pred_check_branch
          %859 = sbr.rel (%p857) target = $region76
        $region75: #{irnn_agent_rollout.1} parent=51 // pred_region
          _
        $region76: #{irnn_agent_rollout.1} parent=51 // pred_fallthru
          _
      $region52: #{irnn_agent_rollout.1} parent=5 // pred_fallthru
        _
      %p860 = scmp.le.s32.totalorder 2, %s17
      // Predicated region
      $region77: #{irnn_agent_rollout.1} parent=5 // pred_check
        %p861 = pneg %p860
      $region78: #{irnn_agent_rollout.1} parent=5 // pred_check_branch
        %863 = sbr.rel (%p861) target = $region80
      $region79: #{irnn_agent_rollout.1} parent=5 // pred_region
        %s864 = ssub.s32 %s17, 2
        // Predicated region
        $region81: #{irnn_agent_rollout.1} parent=79 // pred_check
          %p865 = pneg %p219
        $region82: #{irnn_agent_rollout.1} parent=79 // pred_check_branch
          %867 = sbr.rel (%p865) target = $region84
        $region83: #{irnn_agent_rollout.1} parent=79 // pred_region
          %p868 = scmp.lt.s32.totalorder %s23, 7
          %s869 = scalar_select %p868, %s23, 7
          %s870 = smul.addr %s869, 8
          %s871 = scalar_lea.vmem %s8, %s870
        $region84: #{irnn_agent_rollout.1} parent=79 // pred_fallthru
          _
      $region80: #{irnn_agent_rollout.1} parent=5 // pred_fallthru
        _
    $region6: #{irnn_agent_rollout.1} parent=1 // loop_footer
      %s21 = sadd.s32 1, %s17
    $region7: #{irnn_agent_rollout.1} parent=1 // loop_footer_branch
      %16 = sbr.rel target = $region3
    $region8: #{irnn_agent_rollout.1} parent=1 // loop_exit
      _
    %872 = vsyncpa [#allocation4], 1
    %s873 = scalar_lea.sflag [#allocation4], 1
    %874 = vsyncpa %s873, 1

</llo_original>
